<compile_context>
chip_gen: v7x
topology: tpu7x:2x2x1
jax: 0.10.0
libtpu: 0.0.40
codegen_flags: <defaults>
</compile_context>

<pallas_src>
import functools

import jax
import jax.numpy as jnp
from jax.experimental import pallas as pl
from jax.experimental.pallas import tpu as pltpu


_LANE = 128
_SUBLANE = 8
_MAX_LANE_TILE = 8192                       # cap on tile width along HW
_VMEM_LIMIT_BYTES = 32 * 1024 * 1024        # explicit scoped-VMEM cap (safe on v5e/v6e/v7x)


def _default_max_tile_bytes():
    """~4 MiB streamed tiles on 128-MiB-VMEM parts (v5e/v6e), ~2 MiB elsewhere (v7x)."""
    try:
        kind = jax.devices()[0].device_kind.lower()
    except Exception:
        kind = ""
    if "v5" in kind or "v6" in kind:
        return 4 * 1024 * 1024
    return 2 * 1024 * 1024


def _tile_sizes(R, HW, ebytes, max_tile_bytes):
    """Pick (rows_block, tile_hw) satisfying the (8, 128)/full-extent rules."""
    target_elems = max(_SUBLANE * _LANE, max_tile_bytes // ebytes)
    # Lane tile: multiple of 128, or the full HW extent if it fits in one tile.
    cap_lanes = min(_MAX_LANE_TILE,
                    max(_LANE, (target_elems // _SUBLANE) // _LANE * _LANE))
    tile_hw = HW if HW <= cap_lanes else cap_lanes
    # Row (sublane) block: multiple of 8, or the full R extent, filling the budget.
    rows_cap = max(_SUBLANE, (target_elems // tile_hw) // _SUBLANE * _SUBLANE)
    rows_block = R if R <= rows_cap else rows_cap
    return rows_block, tile_hw


def _partial_sum_kernel(x_ref, psum_ref, *, hw, needs_mask):
    """Pass 1: per-tile partial spatial sums.

    x_ref    : (rows_block, tile_hw) tile of the flattened (R, HW) input
    psum_ref : (rows_block, 1) f32 partial sum for this (row-block, HW-tile)
    """
    tile = x_ref[...].astype(jnp.float32)
    if needs_mask:
        # Ragged last HW tile: Pallas fills out-of-range lanes of a partial input
        # block with unspecified data, so zero them before summing.
        j = pl.program_id(1)
        col = jax.lax.broadcasted_iota(jnp.int32, tile.shape, 1)
        tile = jnp.where(col < (hw - j * tile.shape[1]), tile, 0.0)
    psum_ref[...] = jnp.sum(tile, axis=-1, keepdims=True)


def _apply_kernel(ab_ref, r_ref, o_ref):
    """Pass 2: out = result * a1 + a2, broadcast over the spatial (lane) axis."""
    a1 = ab_ref[:, 0:1]
    a2 = ab_ref[:, 1:2]
    o_ref[...] = (r_ref[...] * a1 + a2).astype(o_ref.dtype)


def adaffine3(result, x, w1, w2, *, max_tile_bytes=None):
    """out = result * conv1(mean(x)) + conv2(mean(x)), broadcast over (H, W).

    w1, w2: 3-tap Conv1d weights; shape (3,) or PyTorch's (1, 1, 3).
    """
    N, C, H, W = x.shape
    R = N * C
    HW = H * W
    if max_tile_bytes is None:
        max_tile_bytes = _default_max_tile_bytes()
    ebytes = jnp.dtype(x.dtype).itemsize

    rows_block, tile_hw = _tile_sizes(R, HW, ebytes, max_tile_bytes)
    n_rows = pl.cdiv(R, rows_block)
    n_hw = pl.cdiv(HW, tile_hw)
    needs_mask = (HW % tile_hw) != 0

    # Free metadata reshapes (no HBM traffic): flatten (N, C) and (H, W).
    x2d = x.reshape(R, HW)
    r2d = result.reshape(R, HW)

    # ---- Pass 1: per-(row-block, HW-tile) partial sums, fully parallel grid.
    psums = pl.pallas_call(
        functools.partial(_partial_sum_kernel, hw=HW, needs_mask=needs_mask),
        out_shape=jax.ShapeDtypeStruct((n_hw, R, 1), jnp.float32),
        grid=(n_rows, n_hw),
        in_specs=[
            pl.BlockSpec((rows_block, tile_hw), lambda i, j: (i, j)),
        ],
        out_specs=pl.BlockSpec((pl.Squeezed(), rows_block, 1), lambda i, j: (j, i, 0)),
        compiler_params=pltpu.CompilerParams(
            dimension_semantics=("parallel", "parallel"),
            vmem_limit_bytes=_VMEM_LIMIT_BYTES,
        ),
    )(x2d)

    # ---- Glue (O(N*C) work in plain JAX): finish the mean, then the two 3-tap
    # channel convs (Conv1d k=3, pad=1, bias=False; cross-correlation, no flip).
    m = (jnp.sum(psums[:, :, 0], axis=0) * (1.0 / float(HW))).reshape(N, C)
    mp = jnp.pad(m, ((0, 0), (1, 1)))                   # zero-padded channel ends
    m_prev, m_cur, m_next = mp[:, :C], mp[:, 1:C + 1], mp[:, 2:]
    w1f = jnp.asarray(w1, jnp.float32).reshape(3)       # accept (3,) or (1, 1, 3)
    w2f = jnp.asarray(w2, jnp.float32).reshape(3)
    a1 = w1f[0] * m_prev + w1f[1] * m_cur + w1f[2] * m_next
    a2 = w2f[0] * m_prev + w2f[1] * m_cur + w2f[2] * m_next
    ab = jnp.stack([a1, a2], axis=-1).reshape(R, 2)     # packed: one small DMA per row block

    # ---- Pass 2: out = result * a1 + a2, streamed lane-dense along HW.
    out = pl.pallas_call(
        _apply_kernel,
        out_shape=jax.ShapeDtypeStruct((R, HW), result.dtype),
        grid=(n_rows, n_hw),
        in_specs=[
            pl.BlockSpec((rows_block, 2), lambda i, j: (i, 0)),        # packed a1/a2
            pl.BlockSpec((rows_block, tile_hw), lambda i, j: (i, j)),  # result
        ],
        out_specs=pl.BlockSpec((rows_block, tile_hw), lambda i, j: (i, j)),
        compiler_params=pltpu.CompilerParams(
            dimension_semantics=("parallel", "parallel"),
            vmem_limit_bytes=_VMEM_LIMIT_BYTES,
        ),
    )(ab, r2d)

    return out.reshape(N, C, H, W)


def adaffine3_reference(result, x, w1, w2):
    # Pure-JAX reference mirroring the PyTorch forward.
    m = jnp.mean(x, axis=(2, 3))                                # (N, C)
    mp = jnp.pad(m, ((0, 0), (1, 1)))                           # (N, C+2)
    C = x.shape[1]
    m_prev, m_cur, m_next = mp[:, 0:C], mp[:, 1:C + 1], mp[:, 2:C + 2]
    a1 = w1[0] * m_prev + w1[1] * m_cur + w1[2] * m_next        # (N, C)
    a2 = w2[0] * m_prev + w2[1] * m_cur + w2[2] * m_next
    return result * a1[:, :, None, None] + a2[:, :, None, None]


if __name__ == "__main__":
    key = jax.random.PRNGKey(0)
    k_x, k_r, k_w1, k_w2 = jax.random.split(key, 4)

    # Conv1d(1, 1, kernel_size=3, bias=False) weights, kaiming-uniform style bound.
    bound = 1.0 / jnp.sqrt(3.0)
    w1 = jax.random.uniform(k_w1, (1, 1, 3), jnp.float32, -bound, bound)  # PyTorch weight shape
    w2 = jax.random.uniform(k_w2, (3,), jnp.float32, -bound, bound)       # pre-squeezed shape
    w1_flat = jnp.reshape(w1, (3,))
    w2_flat = jnp.reshape(w2, (3,))

    def check(N, C, H, W, **kw):
        xx = jax.random.normal(k_x, (N, C, H, W), dtype=jnp.float32)
        rr = jax.random.normal(k_r, (N, C, H, W), dtype=jnp.float32)
        out = jax.block_until_ready(adaffine3(rr, xx, w1, w2, **kw))
        ref = adaffine3_reference(rr, xx, w1_flat, w2_flat)
        assert out.shape == (N, C, H, W), f"bad shape for ({N},{C},{H},{W})"
        assert jnp.allclose(out, ref, atol=1e-5, rtol=1e-5), f"mismatch ({N},{C},{H},{W})"

    # Case 1: lane-aligned HW (16*16 = 256), single HW tile per row block.
    check(2, 4, 16, 16)
    # Case 2: tiny ragged HW (7*7 = 49) -> full-extent lane block, no padding.
    check(2, 4, 7, 7)
    # Case 3: multi-tile HW with ragged tail + partial row block:
    #   R = 12 (not a multiple of 8), HW = 400, forced tile_hw = 128 -> mask path.
    check(3, 4, 20, 20, max_tile_bytes=4096)

    print("KERNEL_OK")
</pallas_src>

<mosaic_0001>
module attributes {stable_mosaic.version = 11 : i64} {
  func.func @_partial_sum_kernel(%arg0: i32, %arg1: i32, %arg2: memref<8x256xf32, #tpu.memory_space<vmem>>, %arg3: memref<1x8x1xf32, #tpu.memory_space<vmem>>) attributes {dimension_semantics = [#tpu.dimension_semantics<parallel>, #tpu.dimension_semantics<parallel>], iteration_bounds = array<i64: 1, 1>, scalar_prefetch = 0 : i64, scratch_operands = 0 : i64, tpu.core_type = #tpu.core_type<tc>, window_params = [{transform_indices = @transform_0, window_bounds = array<i64: 8, 256>}, {transform_indices = @transform_1, window_bounds = array<i64: 1, 8, 1>}]} {
    %c0 = arith.constant 0 : index
    %c0_0 = arith.constant 0 : index
    %0 = vector.load %arg2[%c0, %c0_0] : memref<8x256xf32, #tpu.memory_space<vmem>>, vector<8x256xf32>
    %cst = arith.constant dense<0.000000e+00> : vector<8xf32>
    %1 = vector.multi_reduction <add>, %0, %cst [1] : vector<8x256xf32> to vector<8xf32>
    %2 = vector.shape_cast %1 : vector<8xf32> to vector<8x1xf32>
    %c0_1 = arith.constant 0 : index
    %c0_2 = arith.constant 0 : index
    %c0_3 = arith.constant 0 : index
    %3 = vector.load %arg3[%c0_1, %c0_2, %c0_3] : memref<1x8x1xf32, #tpu.memory_space<vmem>>, vector<1x8x1xf32>
    %4 = vector.shape_cast %3 : vector<1x8x1xf32> to vector<8x1xf32>
    %5 = vector.shape_cast %2 : vector<8x1xf32> to vector<1x8x1xf32>
    tpu.vector_store %arg3[%c0_1, %c0_2, %c0_3], %5 {strides = array<i32>} : memref<1x8x1xf32, #tpu.memory_space<vmem>>, vector<1x8x1xf32>,
    return
  }
  func.func @transform_0(%arg0: i32, %arg1: i32) -> (i32, i32) {
    %c0_i32 = arith.constant 0 : i32
    return %arg0, %arg1 : i32, i32
  }
  func.func @transform_1(%arg0: i32, %arg1: i32) -> (i32, i32, i32) {
    %c0_i32 = arith.constant 0 : i32
    %c0_i32_0 = arith.constant 0 : i32
    return %arg1, %arg0, %c0_i32 : i32, i32, i32
  }
}

</mosaic_0001>

<llo_original>
// kernel: tpu_custom_call.1
$region0: #{tpu_custom_call.1}
  #allocation0 [shape = 'u32[]', space=smem, size = 0x4, offset = 0x4, fixed_abs, tag = 'smem constant byte address 0x4 - core index']
  #allocation1 [shape = 'u32[144,128]{1,0:T(1,128)}', space=vmem, size = 0x12000, scoped, tag = 'internal scratch']
  %s0 = inlined_call_operand.hbm [shape: f32[8,256], index: 0, kind: input, shape index: {}]
  %s1 = inlined_call_operand.vmem [shape: f32[1,8,1], index: 1, kind: output, shape index: {}]
  %s2 = sld [smem:[#allocation0]]
  $region18: #{tpu_custom_call.1} parent=0
    _
  %s4 = ssub.s32 1, %s2
  %s5 = scalar_select 0, %s4, %s2
  $region1: #{tpu_custom_call.1} parent=0
    #allocation2 [shape = 'u8[8192]{0}', space=vmem, size = 0x2000, scoped, tag = 'input window, operand 0, single buffered']
    #allocation3 [shape = 's32[1]{0}', space=sflag, size = 0x4, scoped, tag = 'scoped memory for tpu_custom_call.1']
    %6 = vsyncpa [#allocation3], 0
    // Predicated region
    $region2: #{tpu_custom_call.1} parent=1 // pred_check
      _
    $region3: #{tpu_custom_call.1} parent=1 // pred_check_branch
      %8 = sbr.rel (0) target = $region5
    $region4: #{tpu_custom_call.1} parent=1 // pred_region
      %s10 = ssub.s32 256, 256
      %11 = vsyncadd [#allocation3], %s10
      %s13 = sshll.u32 [#allocation2], 4
      %s14 = int_to_ptr.vmem [resolvable:$true] %s13
      %16 = dma.hbm_to_vmem [thread:$0]  %s0, 256, %s14, [#allocation3]
    $region5: #{tpu_custom_call.1} parent=1 // pred_fallthru
      _
    // Predicated region
    $region6: #{tpu_custom_call.1} parent=1 // pred_check
      _
    $region7: #{tpu_custom_call.1} parent=1 // pred_check_branch
      %18 = sbr.rel (0) target = $region9
    $region8: #{tpu_custom_call.1} parent=1 // pred_region
      %19 = dma.done [#allocation3], 256
    $region9: #{tpu_custom_call.1} parent=1 // pred_fallthru
      _
    %v20 = vld [vmem:[#allocation2] sm:$0xff]
    %v21 = vld [vmem:[#allocation2 + $0x8] sm:$0xff]
    %v22 = vadd.f32 %v20, %v21
    %23 = vadd.xlane.f32.xlu0 %v22
    %v24 = vpop.xlane.xlu0 %23
    %vm25 = vcmask 7168
    %26 = vst.msk [vmem:[%s1] sm:$0xff] %vm25, %v24
    // Predicated region
    $region10: #{tpu_custom_call.1} parent=1 // pred_check
      _
    $region11: #{tpu_custom_call.1} parent=1 // pred_check_branch
      %28 = sbr.rel (0) target = $region13
    $region12: #{tpu_custom_call.1} parent=1 // pred_region
      _
    $region13: #{tpu_custom_call.1} parent=1 // pred_fallthru
      _
    // Predicated region
    $region14: #{tpu_custom_call.1} parent=1 // pred_check
      _
    $region15: #{tpu_custom_call.1} parent=1 // pred_check_branch
      %30 = sbr.rel (0) target = $region17
    $region16: #{tpu_custom_call.1} parent=1 // pred_region
      _
    $region17: #{tpu_custom_call.1} parent=1 // pred_fallthru
      _
    %31 = vsyncpa [#allocation3], 1

</llo_original>
